<compile_context>
chip_gen: v7x
topology: tpu7x:2x2x1
jax: 0.10.0
libtpu: 0.0.40
codegen_flags: <defaults>
</compile_context>

<pallas_src>
import math
import functools

import jax
import jax.numpy as jnp
from jax.experimental import pallas as pl
from jax.experimental.pallas import tpu as pltpu


# ----------------------------------------------------------------------------
# Buffer construction — deterministic, mirrors the PyTorch init exactly.
# ----------------------------------------------------------------------------
def make_positional_encoding(d_model: int, max_len: int = 5000) -> jnp.ndarray:
    position = jnp.arange(max_len, dtype=jnp.float32)[:, None]              # (L, 1)
    div_term = jnp.exp(
        jnp.arange(0, d_model, 2, dtype=jnp.float32) * (-math.log(10000.0) / d_model)
    )                                                                        # (D/2,)
    pe = jnp.zeros((max_len, 1, d_model), dtype=jnp.float32)
    pe = pe.at[:, 0, 0::2].set(jnp.sin(position * div_term))
    pe = pe.at[:, 0, 1::2].set(jnp.cos(position * div_term))
    return pe


# ----------------------------------------------------------------------------
# Kernels (operate on lane-dense 2-D views: x/out/u are (TS, B*D), pe is (TS, D)).
# ----------------------------------------------------------------------------
def _pe_add_kernel(x_ref, pe_ref, o_ref, *, batch: int):
    x = x_ref[...]                                        # (TS, B*D)
    pe = jnp.tile(pe_ref[...].astype(x.dtype), (1, batch))  # (TS, D) -> (TS, B*D)
    o_ref[...] = (x + pe).astype(o_ref.dtype)


def _pe_add_dropout_kernel(x_ref, pe_ref, u_ref, o_ref, *, batch: int, p: float):
    x = x_ref[...]                                        # (TS, B*D)
    pe = jnp.tile(pe_ref[...].astype(x.dtype), (1, batch))
    y = x + pe
    keep = u_ref[...] >= jnp.float32(p)                   # inverted dropout
    scale = jnp.asarray(1.0 / (1.0 - p), dtype=y.dtype)
    o_ref[...] = jnp.where(keep, y * scale, jnp.zeros_like(y)).astype(o_ref.dtype)


# ----------------------------------------------------------------------------
# Wrapper
# ----------------------------------------------------------------------------
def _round_up(v: int, m: int) -> int:
    return ((v + m - 1) // m) * m


def _choose_tile_s(S: int, row_bytes: int, target_bytes: int = 2 * 1024 * 1024) -> int:
    """Tile along the sequence axis: multiple of 8, ~target_bytes per tile."""
    max_ts = max(8, (target_bytes // max(row_bytes, 1)) // 8 * 8)
    return max(8, min(_round_up(S, 8), max_ts))


def positional_encoding(x: jnp.ndarray, pe: jnp.ndarray, *,
                        p: float = 0.1, key=None) -> jnp.ndarray:
    """x: [seq_len, batch, d_model]; pe: [max_len, 1, d_model] (full buffer)."""
    S, B, D = x.shape
    BD = B * D
    p = float(p)

    x2 = x.reshape(S, BD)            # lane-dense view (row-major: b-major, d-minor)
    pe2 = pe[:, 0, :]                # (max_len, D); BlockSpec picks rows per tile

    elem = x.dtype.itemsize
    # per-row VMEM bytes: x tile + out tile (+ uniforms) + pe tile
    row_bytes = BD * (2 * elem + (4 if p > 0.0 else 0)) + D * 4
    TS = _choose_tile_s(S, row_bytes)
    grid = (pl.cdiv(S, TS),)

    x_spec = pl.BlockSpec((TS, BD), lambda i: (i, 0))
    pe_spec = pl.BlockSpec((TS, D), lambda i: (i, 0))
    out_spec = pl.BlockSpec((TS, BD), lambda i: (i, 0))

    compiler_params = pltpu.CompilerParams(
        dimension_semantics=("parallel",),   # shards tiles across both v7x TCs
    )

    if p > 0.0:
        if key is None:
            key = jax.random.PRNGKey(0)
        # Dropout randomness generated host/XLA-side (portable: no TPU-only
        # PRNG primitives inside the kernel), deterministic given `key`.
        u = jax.random.uniform(key, (S, BD), dtype=jnp.float32)
        kernel = functools.partial(_pe_add_dropout_kernel, batch=B, p=p)
        out2 = pl.pallas_call(
            kernel,
            out_shape=jax.ShapeDtypeStruct((S, BD), x.dtype),
            grid=grid,
            in_specs=[x_spec, pe_spec, pl.BlockSpec((TS, BD), lambda i: (i, 0))],
            out_specs=out_spec,
            compiler_params=compiler_params,
        )(x2, pe2, u)
    else:
        kernel = functools.partial(_pe_add_kernel, batch=B)
        out2 = pl.pallas_call(
            kernel,
            out_shape=jax.ShapeDtypeStruct((S, BD), x.dtype),
            grid=grid,
            in_specs=[x_spec, pe_spec],
            out_specs=out_spec,
            compiler_params=compiler_params,
        )(x2, pe2)

    return out2.reshape(S, B, D)


# ----------------------------------------------------------------------------
# Main
# ----------------------------------------------------------------------------
if __name__ == "__main__":
    SEQ, BATCH, D_MODEL = 8, 2, 32
    MAX_LEN = 5000
    DROPOUT_P = 0.1

    x = jax.random.normal(jax.random.PRNGKey(0), (SEQ, BATCH, D_MODEL),
                          dtype=jnp.float32)
    pe = make_positional_encoding(D_MODEL, MAX_LEN)
    ref = x + pe[:SEQ]                                   # (S, B, D) reference

    # 1) Eval semantics (dropout disabled): y == x + pe[:S]
    y_nodrop = jax.block_until_ready(positional_encoding(x, pe, p=0.0))
    assert y_nodrop.shape == (SEQ, BATCH, D_MODEL)
    assert jnp.allclose(y_nodrop, ref, atol=1e-6, rtol=1e-6), "mismatch vs reference"

    # 2) Training semantics: inverted dropout — every output element is either 0
    #    or (x + pe) / (1 - p), deterministically given the key.
    y_drop = jax.block_until_ready(
        positional_encoding(x, pe, p=DROPOUT_P, key=jax.random.PRNGKey(1234)))
    assert y_drop.shape == (SEQ, BATCH, D_MODEL)
    scaled_ref = ref / (1.0 - DROPOUT_P)
    ok = (jnp.abs(y_drop) < 1e-6) | (jnp.abs(y_drop - scaled_ref) < 1e-4)
    assert bool(jnp.all(ok)), "dropout output is neither zero nor scaled(x+pe)"

    print("KERNEL_OK")
</pallas_src>

<mosaic_0001>
module attributes {stable_mosaic.version = 11 : i64} {
  func.func @_pe_add_kernel(%arg0: i32, %arg1: memref<8x64xf32, #tpu.memory_space<vmem>>, %arg2: memref<8x32xf32, #tpu.memory_space<vmem>>, %arg3: memref<8x64xf32, #tpu.memory_space<vmem>>) attributes {dimension_semantics = [#tpu.dimension_semantics<parallel>], iteration_bounds = array<i64: 1>, scalar_prefetch = 0 : i64, scratch_operands = 0 : i64, tpu.core_type = #tpu.core_type<tc>, window_params = [{transform_indices = @transform_0, window_bounds = array<i64: 8, 64>}, {transform_indices = @transform_1, window_bounds = array<i64: 8, 32>}, {transform_indices = @transform_2, window_bounds = array<i64: 8, 64>}]} {
    %c0 = arith.constant 0 : index
    %c0_0 = arith.constant 0 : index
    %0 = vector.load %arg1[%c0, %c0_0] : memref<8x64xf32, #tpu.memory_space<vmem>>, vector<8x64xf32>
    %c0_1 = arith.constant 0 : index
    %c0_2 = arith.constant 0 : index
    %1 = vector.load %arg2[%c0_1, %c0_2] : memref<8x32xf32, #tpu.memory_space<vmem>>, vector<8x32xf32>
    %2 = tpu.concatenate %1, %1 in 1 : vector<8x32xf32>, vector<8x32xf32> -> vector<8x64xf32>
    %3 = arith.addf %0, %2 : vector<8x64xf32>
    %c0_3 = arith.constant 0 : index
    %c0_4 = arith.constant 0 : index
    %4 = vector.load %arg3[%c0_3, %c0_4] : memref<8x64xf32, #tpu.memory_space<vmem>>, vector<8x64xf32>
    tpu.vector_store %arg3[%c0_3, %c0_4], %3 {strides = array<i32>} : memref<8x64xf32, #tpu.memory_space<vmem>>, vector<8x64xf32>,
    return
  }
  func.func @transform_0(%arg0: i32) -> (i32, i32) {
    %c0_i32 = arith.constant 0 : i32
    %c0_i32_0 = arith.constant 0 : i32
    return %arg0, %c0_i32 : i32, i32
  }
  func.func @transform_1(%arg0: i32) -> (i32, i32) {
    %c0_i32 = arith.constant 0 : i32
    %c0_i32_0 = arith.constant 0 : i32
    return %arg0, %c0_i32 : i32, i32
  }
  func.func @transform_2(%arg0: i32) -> (i32, i32) {
    %c0_i32 = arith.constant 0 : i32
    %c0_i32_0 = arith.constant 0 : i32
    return %arg0, %c0_i32 : i32, i32
  }
}

</mosaic_0001>

<llo_original>
// kernel: tpu_custom_call.1
$region0: #{tpu_custom_call.1}
  #allocation0 [shape = 'u32[]', space=smem, size = 0x4, offset = 0x4, fixed_abs, tag = 'smem constant byte address 0x4 - core index']
  #allocation1 [shape = 'u32[144,128]{1,0:T(1,128)}', space=vmem, size = 0x12000, scoped, tag = 'internal scratch']
  %s0 = inlined_call_operand.vmem [shape: f32[8,64], index: 0, kind: input, shape index: {}]
  %s1 = inlined_call_operand.vmem [shape: f32[5000,32], index: 1, kind: input, shape index: {}]
  %s2 = inlined_call_operand.hbm [shape: f32[8,64], index: 2, kind: output, shape index: {}]
  %s3 = sld [smem:[#allocation0]]
  $region18: #{tpu_custom_call.1} parent=0
    _
  %s5 = ssub.s32 1, %s3
  %s6 = scalar_select 0, %s5, %s3
  $region1: #{tpu_custom_call.1} parent=0
    #allocation2 [shape = 'u8[4096]{0}', space=vmem, size = 0x1000, scoped, tag = 'output window, operand 0, single buffered']
    #allocation3 [shape = 's32[1]{0}', space=sflag, size = 0x4, scoped, tag = 'scoped memory for tpu_custom_call.1']
    %7 = vsyncpa [#allocation3], 0
    // Predicated region
    $region2: #{tpu_custom_call.1} parent=1 // pred_check
      _
    $region3: #{tpu_custom_call.1} parent=1 // pred_check_branch
      %9 = sbr.rel (0) target = $region5
    $region4: #{tpu_custom_call.1} parent=1 // pred_region
      _
    $region5: #{tpu_custom_call.1} parent=1 // pred_fallthru
      _
    // Predicated region
    $region6: #{tpu_custom_call.1} parent=1 // pred_check
      _
    $region7: #{tpu_custom_call.1} parent=1 // pred_check_branch
      %11 = sbr.rel (0) target = $region9
    $region8: #{tpu_custom_call.1} parent=1 // pred_region
      _
    $region9: #{tpu_custom_call.1} parent=1 // pred_fallthru
      _
    %v12 = vld [vmem:[%s0] sm:$0xff]
    %v13 = vld [vmem:[%s1] sm:$0xff]
    %15 = vrot.lane.b32.xlu0 %v13, 32
    %v16 = vpop.permute.xlu0 %15
    %vm18 = vcmask 261120
    %v19 = vsel %vm18, %v13, %v16
    %v20 = vadd.f32 %v12, %v19
    %vm21 = vcmask 523264
    %22 = vst.msk [vmem:[#allocation2] sm:$0xff] %vm21, %v20
    // Predicated region
    $region10: #{tpu_custom_call.1} parent=1 // pred_check
      _
    $region11: #{tpu_custom_call.1} parent=1 // pred_check_branch
      %24 = sbr.rel (0) target = $region13
    $region12: #{tpu_custom_call.1} parent=1 // pred_region
      %s26 = ssub.s32 128, 128
      %27 = vsyncadd [#allocation3], %s26
      %s29 = sshll.u32 [#allocation2], 4
      %s30 = int_to_ptr.vmem [resolvable:$true] %s29
      %32 = dma.vmem_to_hbm [thread:$0]  %s30, 128, %s2, [#allocation3]
    $region13: #{tpu_custom_call.1} parent=1 // pred_fallthru
      _
    // Predicated region
    $region14: #{tpu_custom_call.1} parent=1 // pred_check
      _
    $region15: #{tpu_custom_call.1} parent=1 // pred_check_branch
      %34 = sbr.rel (0) target = $region17
    $region16: #{tpu_custom_call.1} parent=1 // pred_region
      %35 = dma.done [#allocation3], 128
    $region17: #{tpu_custom_call.1} parent=1 // pred_fallthru
      _
    %36 = vsyncpa [#allocation3], 1

</llo_original>
